<compile_context>
chip_gen: v7x
topology: tpu7x:2x2x1
jax: 0.10.0
libtpu: 0.0.40
codegen_flags: <defaults>
</compile_context>

<pallas_src>
import functools

import jax
import jax.numpy as jnp
from jax.experimental import pallas as pl
from jax.experimental.pallas import tpu as pltpu


# ----------------------------- Pallas kernel --------------------------------

def _small_basic_block_kernel(x_ref, w1_ref, b1_ref, w2_ref, b2_ref,
                              w3_ref, b3_ref, w4_ref, b4_ref, o_ref, *, H, W):
    """One grid step = `b_tile` images, channel-major (C, H*W) layout.

    x_ref : (b_tile, Cin, HW) f32          o_ref : (b_tile, Cout, HW) f32
    w1    : (mid, Cin)      b1: (mid, 1)
    w2    : (mid, 3*mid)    b2: (mid, 1)    # [kh=0 | kh=1 | kh=2] along K
    w3    : (mid, 3*mid)    b3: (mid, 1)    # [kw=0 | kw=1 | kw=2] along K
    w4    : (Cout, mid)     b4: (Cout, 1)
    """
    HW = H * W
    f32, bf16 = jnp.float32, jnp.bfloat16
    b_tile = x_ref.shape[0]
    mid = w1_ref.shape[0]

    def mm(w, a):  # bf16 x bf16 -> f32 accumulation on the MXU
        return jnp.dot(w, a.astype(bf16), preferred_element_type=f32)

    # Weights / biases loaded once per grid step, reused by every image below.
    w1, w2, w3, w4 = w1_ref[...], w2_ref[...], w3_ref[...], w4_ref[...]
    b1, b2, b3, b4 = b1_ref[...], b2_ref[...], b3_ref[...], b4_ref[...]

    # Per-image edge masks on the flattened lane axis p = h*W + w.  Computed
    # once and shared by all images in the tile, so b_tile > 1 can never make
    # a tap leak across image boundaries.
    col = jax.lax.broadcasted_iota(jnp.int32, (mid, HW), 1)
    wpos = col % W
    m_up, m_dn = col >= W, col < HW - W          # h-1 / h+1 in range
    m_lt, m_rt = wpos > 0, wpos < W - 1          # w-1 / w+1 in range

    for b in range(b_tile):                      # static unroll over images
        x = x_ref[b]                             # (Cin, HW) f32

        # ---- conv1: 1x1 + ReLU (channel matmul; input cast to bf16 here) ----
        y = jnp.maximum(mm(w1, x) + b1, 0.0)                         # (mid, HW)

        # ---- conv2: (3,1) pad (1,0): taps at lane offsets -W / 0 / +W,
        #      fused into ONE K = 3*mid MXU call.  Rolls/selects in f32 for
        #      v5e portability; single bf16 cast inside mm on the concat. ----
        up = jnp.where(m_up, pltpu.roll(y, shift=W, axis=1), 0.0)        # y[h-1]
        dn = jnp.where(m_dn, pltpu.roll(y, shift=HW - W, axis=1), 0.0)   # y[h+1]
        y = jnp.maximum(mm(w2, jnp.concatenate([up, y, dn], axis=0)) + b2, 0.0)

        # ---- conv3: (1,3) pad (0,1): taps at lane offsets -1 / 0 / +1, fused.
        lt = jnp.where(m_lt, pltpu.roll(y, shift=1, axis=1), 0.0)        # y[w-1]
        rt = jnp.where(m_rt, pltpu.roll(y, shift=HW - 1, axis=1), 0.0)   # y[w+1]
        y = jnp.maximum(mm(w3, jnp.concatenate([lt, y, rt], axis=0)) + b3, 0.0)

        # ---- conv4: 1x1, no activation ----
        o_ref[b] = (mm(w4, y) + b4).astype(o_ref.dtype)


# ----------------------------- wrapper ---------------------------------------

def _pick_batch_tile(n):
    """Images per grid step.

    Amortizes the ~0.35us/step overhead on single-TC v5e/v6e while keeping
    >=4 (fallback >=2) grid steps so v7x's two TensorCores both get work and
    the BlockSpec input prefetch can still overlap compute.  Per-step VMEM is
    tiny at LPRNet geometries, so 8 images/step is well within v7x's 64 MiB.
    """
    for min_steps in (4, 2, 1):
        for bt in (8, 4, 2, 1):
            if n % bt == 0 and n // bt >= min_steps:
                return bt
    return 1


@jax.jit
def small_basic_block_forward(x_nchw, p):
    """x_nchw: (N, ch_in, H, W) f32  ->  (N, ch_out, H, W) f32."""
    N, Cin, H, W = x_nchw.shape
    HW = H * W
    mid = p["w1"].shape[0]
    Cout = p["w4"].shape[0]
    b_tile = _pick_batch_tile(N)

    # NCHW is already channel-major: (N,C,H,W) -> (N,C,H*W) is a pure reshape
    # (no transpose, no extra HBM pass).  The f32->bf16 cast happens inside
    # the kernel, so there is no standalone cast pass either.
    x = x_nchw.reshape(N, Cin, HW)

    flops = 2 * N * HW * (Cin * mid + 3 * mid * mid + 3 * mid * mid + mid * Cout)
    bytes_io = 4 * N * HW * (Cin + Cout) + sum(
        int(v.size) * v.dtype.itemsize for v in p.values())

    kernel = functools.partial(_small_basic_block_kernel, H=H, W=W)
    out = pl.pallas_call(
        kernel,
        out_shape=jax.ShapeDtypeStruct((N, Cout, HW), jnp.float32),
        grid=(N // b_tile,),
        in_specs=[
            pl.BlockSpec((b_tile, Cin, HW), lambda n: (n, 0, 0)),   # x
            pl.BlockSpec((mid, Cin), lambda n: (0, 0)),             # w1
            pl.BlockSpec((mid, 1), lambda n: (0, 0)),               # b1
            pl.BlockSpec((mid, 3 * mid), lambda n: (0, 0)),         # w2 (K-cat)
            pl.BlockSpec((mid, 1), lambda n: (0, 0)),               # b2
            pl.BlockSpec((mid, 3 * mid), lambda n: (0, 0)),         # w3 (K-cat)
            pl.BlockSpec((mid, 1), lambda n: (0, 0)),               # b3
            pl.BlockSpec((Cout, mid), lambda n: (0, 0)),            # w4
            pl.BlockSpec((Cout, 1), lambda n: (0, 0)),              # b4
        ],
        out_specs=pl.BlockSpec((b_tile, Cout, HW), lambda n: (n, 0, 0)),
        compiler_params=pltpu.CompilerParams(
            dimension_semantics=("parallel",),   # shard steps over v7x's 2 TCs
        ),
        cost_estimate=pl.CostEstimate(
            flops=flops, transcendentals=0, bytes_accessed=bytes_io),
    )(x, p["w1"], p["b1"], p["w2"], p["b2"], p["w3"], p["b3"], p["w4"], p["b4"])

    # (N, Cout, H*W) -> NCHW is again a pure reshape (no transpose).
    return out.reshape(N, Cout, H, W)


# ----------------------------- parameters ------------------------------------

def init_torch_params(key, ch_in, ch_out):
    """PyTorch-layout conv parameters (OC, IC, KH, KW) with default-style init."""
    mid = ch_out // 4
    ks = jax.random.split(key, 8)

    def u(k, shape, fan_in):
        b = 1.0 / jnp.sqrt(jnp.float32(fan_in))
        return jax.random.uniform(k, shape, jnp.float32, -b, b)

    return {
        "conv1_w": u(ks[0], (mid, ch_in, 1, 1), ch_in),
        "conv1_b": u(ks[1], (mid,), ch_in),
        "conv2_w": u(ks[2], (mid, mid, 3, 1), mid * 3),
        "conv2_b": u(ks[3], (mid,), mid * 3),
        "conv3_w": u(ks[4], (mid, mid, 1, 3), mid * 3),
        "conv3_b": u(ks[5], (mid,), mid * 3),
        "conv4_w": u(ks[6], (ch_out, mid, 1, 1), mid),
        "conv4_b": u(ks[7], (ch_out,), mid),
    }


def prepare_params(torch_params, compute_dtype=jnp.bfloat16):
    """One-time re-layout: PyTorch (OC,IC,KH,KW) -> channel-major matmul form.

    With the (C, H*W) activation layout, weights act as the LHS, so the
    PyTorch (OC, IC) slices are used directly (no transposes).  The 3-tap
    convs are pre-concatenated along K so the kernel issues one MXU call.
    """
    tp = torch_params
    f32 = jnp.float32
    w2, w3 = tp["conv2_w"], tp["conv3_w"]
    return {
        "w1": tp["conv1_w"][:, :, 0, 0].astype(compute_dtype),              # (mid, Cin)
        "b1": tp["conv1_b"].reshape(-1, 1).astype(f32),                     # (mid, 1)
        "w2": jnp.concatenate([w2[:, :, k, 0] for k in range(3)],
                              axis=1).astype(compute_dtype),                # (mid, 3*mid)
        "b2": tp["conv2_b"].reshape(-1, 1).astype(f32),
        "w3": jnp.concatenate([w3[:, :, 0, k] for k in range(3)],
                              axis=1).astype(compute_dtype),                # (mid, 3*mid)
        "b3": tp["conv3_b"].reshape(-1, 1).astype(f32),
        "w4": tp["conv4_w"][:, :, 0, 0].astype(compute_dtype),              # (Cout, mid)
        "b4": tp["conv4_b"].reshape(-1, 1).astype(f32),
    }


# ----------------------------- reference (plain JAX) -------------------------

def reference_forward(x, tp):
    dn = ("NCHW", "OIHW", "NCHW")

    def conv(h, w, b, pad):
        y = jax.lax.conv_general_dilated(h, w, (1, 1), pad, dimension_numbers=dn)
        return y + b.reshape(1, -1, 1, 1)

    y = jax.nn.relu(conv(x, tp["conv1_w"], tp["conv1_b"], [(0, 0), (0, 0)]))
    y = jax.nn.relu(conv(y, tp["conv2_w"], tp["conv2_b"], [(1, 1), (0, 0)]))
    y = jax.nn.relu(conv(y, tp["conv3_w"], tp["conv3_b"], [(0, 0), (1, 1)]))
    return conv(y, tp["conv4_w"], tp["conv4_b"], [(0, 0), (0, 0)])


# ----------------------------- main -------------------------------------------

if __name__ == "__main__":
    key = jax.random.PRNGKey(0)
    kp, kx = jax.random.split(key)

    # Small, LPRNet-like geometry: ch_out divisible by 4 (mid = 32).
    N, ch_in, ch_out, H, W = 2, 64, 128, 16, 16

    torch_params = init_torch_params(kp, ch_in, ch_out)
    x = jax.random.normal(kx, (N, ch_in, H, W), jnp.float32)

    # Snap inputs/weights to the bf16 grid so the f32 reference and the bf16
    # Pallas kernel see identical parameter values (only rounding differs).
    q = lambda a: a.astype(jnp.bfloat16).astype(jnp.float32)
    x = q(x)
    torch_params = jax.tree_util.tree_map(q, torch_params)

    params = prepare_params(torch_params)

    out = jax.block_until_ready(small_basic_block_forward(x, params))
    assert out.shape == (N, ch_out, H, W), out.shape
    assert bool(jnp.all(jnp.isfinite(out)))

    ref = reference_forward(x, torch_params)
    assert jnp.allclose(out, ref, rtol=5e-2, atol=5e-2), float(jnp.max(jnp.abs(out - ref)))

    print("KERNEL_OK")
</pallas_src>

<mosaic_0001>
module attributes {stable_mosaic.version = 11 : i64} {
  func.func @_small_basic_block_kernel(%arg0: i32, %arg1: memref<1x64x256xf32, #tpu.memory_space<vmem>>, %arg2: memref<32x64xbf16, #tpu.memory_space<vmem>>, %arg3: memref<32x1xf32, #tpu.memory_space<vmem>>, %arg4: memref<32x96xbf16, #tpu.memory_space<vmem>>, %arg5: memref<32x1xf32, #tpu.memory_space<vmem>>, %arg6: memref<32x96xbf16, #tpu.memory_space<vmem>>, %arg7: memref<32x1xf32, #tpu.memory_space<vmem>>, %arg8: memref<128x32xbf16, #tpu.memory_space<vmem>>, %arg9: memref<128x1xf32, #tpu.memory_space<vmem>>, %arg10: memref<1x128x256xf32, #tpu.memory_space<vmem>>) attributes {dimension_semantics = [#tpu.dimension_semantics<parallel>], iteration_bounds = array<i64: 2>, scalar_prefetch = 0 : i64, scratch_operands = 0 : i64, tpu.core_type = #tpu.core_type<tc>, window_params = [{transform_indices = @transform_0, window_bounds = array<i64: 1, 64, 256>}, {pipeline_mode = #tpu.pipeline_mode<synchronous>, transform_indices = @transform_1, window_bounds = array<i64: 32, 64>}, {pipeline_mode = #tpu.pipeline_mode<synchronous>, transform_indices = @transform_2, window_bounds = array<i64: 32, 1>}, {pipeline_mode = #tpu.pipeline_mode<synchronous>, transform_indices = @transform_3, window_bounds = array<i64: 32, 96>}, {pipeline_mode = #tpu.pipeline_mode<synchronous>, transform_indices = @transform_4, window_bounds = array<i64: 32, 1>}, {pipeline_mode = #tpu.pipeline_mode<synchronous>, transform_indices = @transform_5, window_bounds = array<i64: 32, 96>}, {pipeline_mode = #tpu.pipeline_mode<synchronous>, transform_indices = @transform_6, window_bounds = array<i64: 32, 1>}, {pipeline_mode = #tpu.pipeline_mode<synchronous>, transform_indices = @transform_7, window_bounds = array<i64: 128, 32>}, {pipeline_mode = #tpu.pipeline_mode<synchronous>, transform_indices = @transform_8, window_bounds = array<i64: 128, 1>}, {transform_indices = @transform_9, window_bounds = array<i64: 1, 128, 256>}]} {
    %c0 = arith.constant 0 : index
    %c0_0 = arith.constant 0 : index
    %0 = vector.load %arg2[%c0, %c0_0] : memref<32x64xbf16, #tpu.memory_space<vmem>>, vector<32x64xbf16>
    %c0_1 = arith.constant 0 : index
    %c0_2 = arith.constant 0 : index
    %1 = vector.load %arg4[%c0_1, %c0_2] : memref<32x96xbf16, #tpu.memory_space<vmem>>, vector<32x96xbf16>
    %c0_3 = arith.constant 0 : index
    %c0_4 = arith.constant 0 : index
    %2 = vector.load %arg6[%c0_3, %c0_4] : memref<32x96xbf16, #tpu.memory_space<vmem>>, vector<32x96xbf16>
    %c0_5 = arith.constant 0 : index
    %c0_6 = arith.constant 0 : index
    %3 = vector.load %arg8[%c0_5, %c0_6] : memref<128x32xbf16, #tpu.memory_space<vmem>>, vector<128x32xbf16>
    %c0_7 = arith.constant 0 : index
    %c0_8 = arith.constant 0 : index
    %4 = vector.load %arg3[%c0_7, %c0_8] : memref<32x1xf32, #tpu.memory_space<vmem>>, vector<32x1xf32>
    %c0_9 = arith.constant 0 : index
    %c0_10 = arith.constant 0 : index
    %5 = vector.load %arg5[%c0_9, %c0_10] : memref<32x1xf32, #tpu.memory_space<vmem>>, vector<32x1xf32>
    %c0_11 = arith.constant 0 : index
    %c0_12 = arith.constant 0 : index
    %6 = vector.load %arg7[%c0_11, %c0_12] : memref<32x1xf32, #tpu.memory_space<vmem>>, vector<32x1xf32>
    %c0_13 = arith.constant 0 : index
    %c0_14 = arith.constant 0 : index
    %7 = vector.load %arg9[%c0_13, %c0_14] : memref<128x1xf32, #tpu.memory_space<vmem>>, vector<128x1xf32>
    %8 = tpu.iota {dimensions = array<i32: 1>} : vector<32x256xi32>
    %c16_i32 = arith.constant 16 : i32
    %c0_i32 = arith.constant 0 : i32
    %9 = arith.cmpi eq, %c16_i32, %c0_i32 : i32
    %c1_i32 = arith.constant 1 : i32
    %10 = arith.select %9, %c1_i32, %c16_i32 : i32
    %11 = vector.broadcast %10 : i32 to vector<32x256xi32>
    %12 = arith.remsi %8, %11 : vector<32x256xi32>
    %c0_i32_15 = arith.constant 0 : i32
    %13 = vector.broadcast %c0_i32_15 : i32 to vector<32x256xi32>
    %14 = arith.cmpi ne, %12, %13 : vector<32x256xi32>
    %c0_i32_16 = arith.constant 0 : i32
    %15 = vector.broadcast %c0_i32_16 : i32 to vector<32x256xi32>
    %16 = arith.cmpi slt, %12, %15 : vector<32x256xi32>
    %c0_i32_17 = arith.constant 0 : i32
    %17 = arith.cmpi slt, %10, %c0_i32_17 : i32
    %18 = vector.broadcast %17 : i1 to vector<32x256xi1>
    %19 = vector.broadcast %18 : vector<32x256xi1> to vector<32x256xi1>
    %20 = arith.xori %16, %19 : vector<32x256xi1>
    %21 = arith.andi %20, %14 : vector<32x256xi1>
    %22 = vector.broadcast %10 : i32 to vector<32x256xi32>
    %23 = arith.addi %12, %22 : vector<32x256xi32>
    %24 = arith.select %21, %23, %12 : vector<32x256xi1>, vector<32x256xi32>
    %c16_i32_18 = arith.constant 16 : i32
    %25 = vector.broadcast %c16_i32_18 : i32 to vector<32x256xi32>
    %26 = arith.cmpi sge, %8, %25 : vector<32x256xi32>
    %c240_i32 = arith.constant 240 : i32
    %27 = vector.broadcast %c240_i32 : i32 to vector<32x256xi32>
    %28 = arith.cmpi slt, %8, %27 : vector<32x256xi32>
    %c0_i32_19 = arith.constant 0 : i32
    %29 = vector.broadcast %c0_i32_19 : i32 to vector<32x256xi32>
    %30 = arith.cmpi sgt, %24, %29 : vector<32x256xi32>
    %c15_i32 = arith.constant 15 : i32
    %31 = vector.broadcast %c15_i32 : i32 to vector<32x256xi32>
    %32 = arith.cmpi slt, %24, %31 : vector<32x256xi32>
    %c0_20 = arith.constant 0 : index
    %c0_21 = arith.constant 0 : index
    %c0_22 = arith.constant 0 : index
    %33 = vector.load %arg1[%c0_20, %c0_21, %c0_22] : memref<1x64x256xf32, #tpu.memory_space<vmem>>, vector<1x64x256xf32>
    %34 = vector.shape_cast %33 : vector<1x64x256xf32> to vector<64x256xf32>
    %35 = arith.truncf %34 : vector<64x256xf32> to vector<64x256xbf16>
    %cst = arith.constant dense<0.000000e+00> : vector<32x256xf32>
    %36 = tpu.matmul %0, %35, %cst {dimension_numbers = #tpu.dot_dimension_numbers<[1], [0], [0], [1], [0, 0, 1, 1], [], []>} : vector<32x64xbf16>, vector<64x256xbf16>, vector<32x256xf32> -> vector<32x256xf32>
    %37 = vector.broadcast %4 : vector<32x1xf32> to vector<32x256xf32>
    %38 = arith.addf %36, %37 : vector<32x256xf32>
    %cst_23 = arith.constant 0.000000e+00 : f32
    %39 = vector.broadcast %cst_23 : f32 to vector<32x256xf32>
    %40 = arith.maximumf %38, %39 : vector<32x256xf32>
    %c16_i32_24 = arith.constant 16 : i32
    %41 = tpu.dynamic_rotate %40 by %c16_i32_24 dim 1 : vector<32x256xf32>, i32 -> vector<32x256xf32>
    %cst_25 = arith.constant 0.000000e+00 : f32
    %42 = vector.broadcast %cst_25 : f32 to vector<32x256xf32>
    %43 = arith.select %26, %41, %42 : vector<32x256xi1>, vector<32x256xf32>
    %c240_i32_26 = arith.constant 240 : i32
    %44 = tpu.dynamic_rotate %40 by %c240_i32_26 dim 1 : vector<32x256xf32>, i32 -> vector<32x256xf32>
    %cst_27 = arith.constant 0.000000e+00 : f32
    %45 = vector.broadcast %cst_27 : f32 to vector<32x256xf32>
    %46 = arith.select %28, %44, %45 : vector<32x256xi1>, vector<32x256xf32>
    %47 = tpu.concatenate %43, %40, %46 in 0 : vector<32x256xf32>, vector<32x256xf32>, vector<32x256xf32> -> vector<96x256xf32>
    %48 = arith.truncf %47 : vector<96x256xf32> to vector<96x256xbf16>
    %cst_28 = arith.constant dense<0.000000e+00> : vector<32x256xf32>
    %49 = tpu.matmul %1, %48, %cst_28 {dimension_numbers = #tpu.dot_dimension_numbers<[1], [0], [0], [1], [0, 0, 1, 1], [], []>} : vector<32x96xbf16>, vector<96x256xbf16>, vector<32x256xf32> -> vector<32x256xf32>
    %50 = vector.broadcast %5 : vector<32x1xf32> to vector<32x256xf32>
    %51 = arith.addf %49, %50 : vector<32x256xf32>
    %cst_29 = arith.constant 0.000000e+00 : f32
    %52 = vector.broadcast %cst_29 : f32 to vector<32x256xf32>
    %53 = arith.maximumf %51, %52 : vector<32x256xf32>
    %c1_i32_30 = arith.constant 1 : i32
    %54 = tpu.dynamic_rotate %53 by %c1_i32_30 dim 1 : vector<32x256xf32>, i32 -> vector<32x256xf32>
    %cst_31 = arith.constant 0.000000e+00 : f32
    %55 = vector.broadcast %cst_31 : f32 to vector<32x256xf32>
    %56 = arith.select %30, %54, %55 : vector<32x256xi1>, vector<32x256xf32>
    %c255_i32 = arith.constant 255 : i32
    %57 = tpu.dynamic_rotate %53 by %c255_i32 dim 1 : vector<32x256xf32>, i32 -> vector<32x256xf32>
    %cst_32 = arith.constant 0.000000e+00 : f32
    %58 = vector.broadcast %cst_32 : f32 to vector<32x256xf32>
    %59 = arith.select %32, %57, %58 : vector<32x256xi1>, vector<32x256xf32>
    %60 = tpu.concatenate %56, %53, %59 in 0 : vector<32x256xf32>, vector<32x256xf32>, vector<32x256xf32> -> vector<96x256xf32>
    %61 = arith.truncf %60 : vector<96x256xf32> to vector<96x256xbf16>
    %cst_33 = arith.constant dense<0.000000e+00> : vector<32x256xf32>
    %62 = tpu.matmul %2, %61, %cst_33 {dimension_numbers = #tpu.dot_dimension_numbers<[1], [0], [0], [1], [0, 0, 1, 1], [], []>} : vector<32x96xbf16>, vector<96x256xbf16>, vector<32x256xf32> -> vector<32x256xf32>
    %63 = vector.broadcast %6 : vector<32x1xf32> to vector<32x256xf32>
    %64 = arith.addf %62, %63 : vector<32x256xf32>
    %cst_34 = arith.constant 0.000000e+00 : f32
    %65 = vector.broadcast %cst_34 : f32 to vector<32x256xf32>
    %66 = arith.maximumf %64, %65 : vector<32x256xf32>
    %67 = arith.truncf %66 : vector<32x256xf32> to vector<32x256xbf16>
    %cst_35 = arith.constant dense<0.000000e+00> : vector<128x256xf32>
    %68 = tpu.matmul %3, %67, %cst_35 {dimension_numbers = #tpu.dot_dimension_numbers<[1], [0], [0], [1], [0, 0, 1, 1], [], []>} : vector<128x32xbf16>, vector<32x256xbf16>, vector<128x256xf32> -> vector<128x256xf32>
    %69 = vector.broadcast %7 : vector<128x1xf32> to vector<128x256xf32>
    %70 = arith.addf %68, %69 : vector<128x256xf32>
    %c0_36 = arith.constant 0 : index
    %c0_37 = arith.constant 0 : index
    %c0_38 = arith.constant 0 : index
    %71 = vector.load %arg10[%c0_36, %c0_37, %c0_38] : memref<1x128x256xf32, #tpu.memory_space<vmem>>, vector<1x128x256xf32>
    %72 = vector.shape_cast %71 : vector<1x128x256xf32> to vector<128x256xf32>
    %73 = vector.shape_cast %70 : vector<128x256xf32> to vector<1x128x256xf32>
    tpu.vector_store %arg10[%c0_36, %c0_37, %c0_38], %73 {strides = array<i32>} : memref<1x128x256xf32, #tpu.memory_space<vmem>>, vector<1x128x256xf32>,
    return
  }
  func.func @transform_0(%arg0: i32) -> (i32, i32, i32) {
    %c0_i32 = arith.constant 0 : i32
    %c0_i32_0 = arith.constant 0 : i32
    %c0_i32_1 = arith.constant 0 : i32
    return %arg0, %c0_i32, %c0_i32_0 : i32, i32, i32
  }
  func.func @transform_1(%arg0: i32) -> (i32, i32) {
    %c0_i32 = arith.constant 0 : i32
    %c0_i32_0 = arith.constant 0 : i32
    %c0_i32_1 = arith.constant 0 : i32
    return %c0_i32, %c0_i32_0 : i32, i32
  }
  func.func @transform_2(%arg0: i32) -> (i32, i32) {
    %c0_i32 = arith.constant 0 : i32
    %c0_i32_0 = arith.constant 0 : i32
    %c0_i32_1 = arith.constant 0 : i32
    return %c0_i32, %c0_i32_0 : i32, i32
  }
  func.func @transform_3(%arg0: i32) -> (i32, i32) {
    %c0_i32 = arith.constant 0 : i32
    %c0_i32_0 = arith.constant 0 : i32
    %c0_i32_1 = arith.constant 0 : i32
    return %c0_i32, %c0_i32_0 : i32, i32
  }
  func.func @transform_4(%arg0: i32) -> (i32, i32) {
    %c0_i32 = arith.constant 0 : i32
    %c0_i32_0 = arith.constant 0 : i32
    %c0_i32_1 = arith.constant 0 : i32
    return %c0_i32, %c0_i32_0 : i32, i32
  }
  func.func @transform_5(%arg0: i32) -> (i32, i32) {
    %c0_i32 = arith.constant 0 : i32
    %c0_i32_0 = arith.constant 0 : i32
    %c0_i32_1 = arith.constant 0 : i32
    return %c0_i32, %c0_i32_0 : i32, i32
  }
  func.func @transform_6(%arg0: i32) -> (i32, i32) {
    %c0_i32 = arith.constant 0 : i32
    %c0_i32_0 = arith.constant 0 : i32
    %c0_i32_1 = arith.constant 0 : i32
    return %c0_i32, %c0_i32_0 : i32, i32
  }
  func.func @transform_7(%arg0: i32) -> (i32, i32) {
    %c0_i32 = arith.constant 0 : i32
    %c0_i32_0 = arith.constant 0 : i32
    %c0_i32_1 = arith.constant 0 : i32
    return %c0_i32, %c0_i32_0 : i32, i32
  }
  func.func @transform_8(%arg0: i32) -> (i32, i32) {
    %c0_i32 = arith.constant 0 : i32
    %c0_i32_0 = arith.constant 0 : i32
    %c0_i32_1 = arith.constant 0 : i32
    return %c0_i32, %c0_i32_0 : i32, i32
  }
  func.func @transform_9(%arg0: i32) -> (i32, i32, i32) {
    %c0_i32 = arith.constant 0 : i32
    %c0_i32_0 = arith.constant 0 : i32
    %c0_i32_1 = arith.constant 0 : i32
    return %arg0, %c0_i32, %c0_i32_0 : i32, i32, i32
  }
}

</mosaic_0001>

<llo_original>
// kernel: small_basic_block_forward.1
$region0: #{small_basic_block_forward.1}
  #allocation0 [shape = 'u32[]', space=smem, size = 0x4, offset = 0x4, fixed_abs, tag = 'smem constant byte address 0x4 - core index']
  #allocation1 [shape = 'u32[144,128]{1,0:T(1,128)}', space=vmem, size = 0x12000, scoped, tag = 'internal scratch']
  %s0 = inlined_call_operand.vmem [shape: f32[2,64,256], index: 0, kind: input, shape index: {}]
  %s1 = inlined_call_operand.vmem [shape: bf16[32,64], index: 1, kind: input, shape index: {}]
  %s2 = inlined_call_operand.vmem [shape: f32[32,1], index: 2, kind: input, shape index: {}]
  %s3 = inlined_call_operand.vmem [shape: bf16[32,96], index: 3, kind: input, shape index: {}]
  %s4 = inlined_call_operand.vmem [shape: f32[32,1], index: 4, kind: input, shape index: {}]
  %s5 = inlined_call_operand.vmem [shape: bf16[32,96], index: 5, kind: input, shape index: {}]
  %s6 = inlined_call_operand.vmem [shape: f32[32,1], index: 6, kind: input, shape index: {}]
  %s7 = inlined_call_operand.vmem [shape: bf16[128,32], index: 7, kind: input, shape index: {}]
  %s8 = inlined_call_operand.vmem [shape: f32[128,1], index: 8, kind: input, shape index: {}]
  %s9 = inlined_call_operand.vmem [shape: f32[2,128,256], index: 9, kind: output, shape index: {}]
  %s10 = sld [smem:[#allocation0]]
  $region69: #{small_basic_block_forward.1} parent=0
    _
  %s12 = ssub.s32 1, %s10
  %s13 = scalar_select 0, %s12, %s10
  loop: start=0, step=1, limit=4
  $region2: #{small_basic_block_forward.1} parent=0 // loop_pre_header
    _
  $region3: #{small_basic_block_forward.1} parent=0 // loop_header
    %s15 = sphi 0, %s19
    %p16 = scmp.ge.s32.totalorder %s15, 4
    %s25 = sphi 0, %s27
    %s28 = sphi 0, %s25
    %s29 = sphi 0, %s28
    %s45 = sphi 0, %s29
    %s49 = sphi 0, %s49
    %s51 = sphi 0, %s49
    %s52 = sphi 0, %s51
    %s66 = sphi 0, %s52
    %s70 = sphi 0, %s70
    %s72 = sphi 0, %s70
    %s73 = sphi 0, %s72
    %s87 = sphi 0, %s73
    %s91 = sphi 0, %s91
    %s93 = sphi 0, %s91
    %s94 = sphi 0, %s93
    %s108 = sphi 0, %s94
    %s112 = sphi 0, %s112
    %s114 = sphi 0, %s112
    %s115 = sphi 0, %s114
    %s129 = sphi 0, %s115
    %s133 = sphi 0, %s133
    %s135 = sphi 0, %s133
    %s136 = sphi 0, %s135
    %s150 = sphi 0, %s136
    %s154 = sphi 0, %s154
    %s156 = sphi 0, %s154
    %s157 = sphi 0, %s156
    %s171 = sphi 0, %s157
    %s175 = sphi 0, %s175
    %s177 = sphi 0, %s175
    %s178 = sphi 0, %s177
    %s192 = sphi 0, %s178
    %s196 = sphi 0, %s196
    %s198 = sphi 0, %s196
    %s199 = sphi 0, %s198
    %s213 = sphi 0, %s199
    %s219 = sphi 0, %s221
    %s222 = sphi 0, %s219
    %s223 = sphi 0, %s222
    %s239 = sphi 0, %s223
  $region4: #{small_basic_block_forward.1} parent=0 // loop_header_branch
    %18 = sbr.rel (%p16) target = $region8
  $region5: #{small_basic_block_forward.1} parent=0 // loop_body
    %s20 = ssub.s32 %s15, 1
    %s21 = ssub.s32 %s15, 2
    %s22 = sadd.s32 %s15, 1
    %s23 = ssub.s32 %s15, %s22
    %p24 = scmp.eq.s32.totalorder %s23, 0
    %s26 = sadd.s32 %s25, 1
    %s27 = scalar_select %p24, %s25, %s26
    %p30 = pneg %p24
    %p31 = scmp.eq.s32.totalorder %s15, 1
    %p32 = por %p30, %p31
    %p33 = scmp.ne.s32.totalorder %s25, %s28
    %p34 = scmp.eq.s32.totalorder %s15, 0
    %p35 = por %p33, %p34
    %p36 = scmp.ne.s32.totalorder %s25, %s28
    %p37 = scmp.eq.s32.totalorder %s20, 1
    %p38 = por %p36, %p37
    %p39 = scmp.ne.s32.totalorder %s28, %s29
    %p40 = scmp.eq.s32.totalorder %s20, 0
    %p41 = por %p39, %p40
    %p42 = scmp.ne.s32.totalorder %s28, %s29
    %p43 = scmp.eq.s32.totalorder %s21, 1
    %p44 = por %p42, %p43
    %p46 = scmp.ne.s32.totalorder %s29, %s45
    %p47 = scmp.eq.s32.totalorder %s21, 0
    %p48 = por %p46, %p47
    %s50 = sadd.s32 %s49, 1
    %p53 = scmp.eq.s32.totalorder %s15, 1
    %p54 = scmp.ne.s32.totalorder %s49, %s51
    %p55 = scmp.eq.s32.totalorder %s15, 0
    %p56 = por %p54, %p55
    %p57 = scmp.ne.s32.totalorder %s49, %s51
    %p58 = scmp.eq.s32.totalorder %s20, 1
    %p59 = por %p57, %p58
    %p60 = scmp.ne.s32.totalorder %s51, %s52
    %p61 = scmp.eq.s32.totalorder %s20, 0
    %p62 = por %p60, %p61
    %p63 = scmp.ne.s32.totalorder %s51, %s52
    %p64 = scmp.eq.s32.totalorder %s21, 1
    %p65 = por %p63, %p64
    %p67 = scmp.ne.s32.totalorder %s52, %s66
    %p68 = scmp.eq.s32.totalorder %s21, 0
    %p69 = por %p67, %p68
    %s71 = sadd.s32 %s70, 1
    %p74 = scmp.eq.s32.totalorder %s15, 1
    %p75 = scmp.ne.s32.totalorder %s70, %s72
    %p76 = scmp.eq.s32.totalorder %s15, 0
    %p77 = por %p75, %p76
    %p78 = scmp.ne.s32.totalorder %s70, %s72
    %p79 = scmp.eq.s32.totalorder %s20, 1
    %p80 = por %p78, %p79
    %p81 = scmp.ne.s32.totalorder %s72, %s73
    %p82 = scmp.eq.s32.totalorder %s20, 0
    %p83 = por %p81, %p82
    %p84 = scmp.ne.s32.totalorder %s72, %s73
    %p85 = scmp.eq.s32.totalorder %s21, 1
    %p86 = por %p84, %p85
    %p88 = scmp.ne.s32.totalorder %s73, %s87
    %p89 = scmp.eq.s32.totalorder %s21, 0
    %p90 = por %p88, %p89
    %s92 = sadd.s32 %s91, 1
    %p95 = scmp.eq.s32.totalorder %s15, 1
    %p96 = scmp.ne.s32.totalorder %s91, %s93
    %p97 = scmp.eq.s32.totalorder %s15, 0
    %p98 = por %p96, %p97
    %p99 = scmp.ne.s32.totalorder %s91, %s93
    %p100 = scmp.eq.s32.totalorder %s20, 1
    %p101 = por %p99, %p100
    %p102 = scmp.ne.s32.totalorder %s93, %s94
    %p103 = scmp.eq.s32.totalorder %s20, 0
    %p104 = por %p102, %p103
    %p105 = scmp.ne.s32.totalorder %s93, %s94
    %p106 = scmp.eq.s32.totalorder %s21, 1
    %p107 = por %p105, %p106
    %p109 = scmp.ne.s32.totalorder %s94, %s108
    %p110 = scmp.eq.s32.totalorder %s21, 0
    %p111 = por %p109, %p110
    %s113 = sadd.s32 %s112, 1
    %p116 = scmp.eq.s32.totalorder %s15, 1
    %p117 = scmp.ne.s32.totalorder %s112, %s114
    %p118 = scmp.eq.s32.totalorder %s15, 0
    %p119 = por %p117, %p118
    %p120 = scmp.ne.s32.totalorder %s112, %s114
    %p121 = scmp.eq.s32.totalorder %s20, 1
    %p122 = por %p120, %p121
    %p123 = scmp.ne.s32.totalorder %s114, %s115
    %p124 = scmp.eq.s32.totalorder %s20, 0
    %p125 = por %p123, %p124
    %p126 = scmp.ne.s32.totalorder %s114, %s115
    %p127 = scmp.eq.s32.totalorder %s21, 1
    %p128 = por %p126, %p127
    %p130 = scmp.ne.s32.totalorder %s115, %s129
    %p131 = scmp.eq.s32.totalorder %s21, 0
    %p132 = por %p130, %p131
    %s134 = sadd.s32 %s133, 1
    %p137 = scmp.eq.s32.totalorder %s15, 1
    %p138 = scmp.ne.s32.totalorder %s133, %s135
    %p139 = scmp.eq.s32.totalorder %s15, 0
    %p140 = por %p138, %p139
    %p141 = scmp.ne.s32.totalorder %s133, %s135
    %p142 = scmp.eq.s32.totalorder %s20, 1
    %p143 = por %p141, %p142
    %p144 = scmp.ne.s32.totalorder %s135, %s136
    %p145 = scmp.eq.s32.totalorder %s20, 0
    %p146 = por %p144, %p145
    %p147 = scmp.ne.s32.totalorder %s135, %s136
    %p148 = scmp.eq.s32.totalorder %s21, 1
    %p149 = por %p147, %p148
    %p151 = scmp.ne.s32.totalorder %s136, %s150
    %p152 = scmp.eq.s32.totalorder %s21, 0
    %p153 = por %p151, %p152
    %s155 = sadd.s32 %s154, 1
    %p158 = scmp.eq.s32.totalorder %s15, 1
    %p159 = scmp.ne.s32.totalorder %s154, %s156
    %p160 = scmp.eq.s32.totalorder %s15, 0
    %p161 = por %p159, %p160
    %p162 = scmp.ne.s32.totalorder %s154, %s156
    %p163 = scmp.eq.s32.totalorder %s20, 1
    %p164 = por %p162, %p163
    %p165 = scmp.ne.s32.totalorder %s156, %s157
    %p166 = scmp.eq.s32.totalorder %s20, 0
    %p167 = por %p165, %p166
    %p168 = scmp.ne.s32.totalorder %s156, %s157
    %p169 = scmp.eq.s32.totalorder %s21, 1
    %p170 = por %p168, %p169
    %p172 = scmp.ne.s32.totalorder %s157, %s171
    %p173 = scmp.eq.s32.totalorder %s21, 0
    %p174 = por %p172, %p173
    %s176 = sadd.s32 %s175, 1
    %p179 = scmp.eq.s32.totalorder %s15, 1
    %p180 = scmp.ne.s32.totalorder %s175, %s177
    %p181 = scmp.eq.s32.totalorder %s15, 0
    %p182 = por %p180, %p181
    %p183 = scmp.ne.s32.totalorder %s175, %s177
    %p184 = scmp.eq.s32.totalorder %s20, 1
    %p185 = por %p183, %p184
    %p186 = scmp.ne.s32.totalorder %s177, %s178
    %p187 = scmp.eq.s32.totalorder %s20, 0
    %p188 = por %p186, %p187
    %p189 = scmp.ne.s32.totalorder %s177, %s178
    %p190 = scmp.eq.s32.totalorder %s21, 1
    %p191 = por %p189, %p190
    %p193 = scmp.ne.s32.totalorder %s178, %s192
    %p194 = scmp.eq.s32.totalorder %s21, 0
    %p195 = por %p193, %p194
    %s197 = sadd.s32 %s196, 1
    %p200 = scmp.eq.s32.totalorder %s15, 1
    %p201 = scmp.ne.s32.totalorder %s196, %s198
    %p202 = scmp.eq.s32.totalorder %s15, 0
    %p203 = por %p201, %p202
    %p204 = scmp.ne.s32.totalorder %s196, %s198
    %p205 = scmp.eq.s32.totalorder %s20, 1
    %p206 = por %p204, %p205
    %p207 = scmp.ne.s32.totalorder %s198, %s199
    %p208 = scmp.eq.s32.totalorder %s20, 0
    %p209 = por %p207, %p208
    %p210 = scmp.ne.s32.totalorder %s198, %s199
    %p211 = scmp.eq.s32.totalorder %s21, 1
    %p212 = por %p210, %p211
    %p214 = scmp.ne.s32.totalorder %s199, %s213
    %p215 = scmp.eq.s32.totalorder %s21, 0
    %p216 = por %p214, %p215
    %s217 = ssub.s32 %s15, %s22
    %p218 = scmp.eq.s32.totalorder %s217, 0
    %s220 = sadd.s32 %s219, 1
    %s221 = scalar_select %p218, %s219, %s220
    %p224 = pneg %p218
    %p225 = scmp.eq.s32.totalorder %s15, 1
    %p226 = por %p224, %p225
    %p227 = scmp.ne.s32.totalorder %s219, %s222
    %p228 = scmp.eq.s32.totalorder %s15, 0
    %p229 = por %p227, %p228
    %p230 = scmp.ne.s32.totalorder %s219, %s222
    %p231 = scmp.eq.s32.totalorder %s20, 1
    %p232 = por %p230, %p231
    %p233 = scmp.ne.s32.totalorder %s222, %s223
    %p234 = scmp.eq.s32.totalorder %s20, 0
    %p235 = por %p233, %p234
    %p236 = scmp.ne.s32.totalorder %s222, %s223
    %p237 = scmp.eq.s32.totalorder %s21, 1
    %p238 = por %p236, %p237
    %p240 = scmp.ne.s32.totalorder %s223, %s239
    %p241 = scmp.eq.s32.totalorder %s21, 0
    %p242 = por %p240, %p241
    %p243 = scmp.le.s32.totalorder 1, %s15
    %p244 = scmp.lt.s32.totalorder %s15, 3
    %p245 = pnand %p243, %p244
    %p246 = pneg %p245
    // Predicated region
    $region9: #{small_basic_block_forward.1} parent=5 // pred_check
      _
    $region10: #{small_basic_block_forward.1} parent=5 // pred_check_branch
      %248 = sbr.rel (%p245) target = $region12
    $region11: #{small_basic_block_forward.1} parent=5 // pred_region
      %s249 = ssub.s32 %s15, 1
      // Predicated region
      $region13: #{small_basic_block_forward.1} parent=11 // pred_check
        %p250 = pneg %p62
      $region14: #{small_basic_block_forward.1} parent=11 // pred_check_branch
        %252 = sbr.rel (%p250) target = $region16
      $region15: #{small_basic_block_forward.1} parent=11 // pred_region
        _
      $region16: #{small_basic_block_forward.1} parent=11 // pred_fallthru
        _
      // Predicated region
      $region17: #{small_basic_block_forward.1} parent=11 // pred_check
        %p253 = pneg %p83
      $region18: #{small_basic_block_forward.1} parent=11 // pred_check_branch
        %255 = sbr.rel (%p253) target = $region20
      $region19: #{small_basic_block_forward.1} parent=11 // pred_region
        _
      $region20: #{small_basic_block_forward.1} parent=11 // pred_fallthru
        _
      // Predicated region
      $region21: #{small_basic_block_forward.1} parent=11 // pred_check
        %p256 = pneg %p104
      $region22: #{small_basic_block_forward.1} parent=11 // pred_check_branch
        %258 = sbr.rel (%p256) target = $region24
      $region23: #{small_basic_block_forward.1} parent=11 // pred_region
        _
      $region24: #{small_basic_block_forward.1} parent=11 // pred_fallthru
        _
      // Predicated region
      $region25: #{small_basic_block_forward.1} parent=11 // pred_check
        %p259 = pneg %p125
      $region26: #{small_basic_block_forward.1} parent=11 // pred_check_branch
        %261 = sbr.rel (%p259) target = $region28
      $region27: #{small_basic_block_forward.1} parent=11 // pred_region
        _
      $region28: #{small_basic_block_forward.1} parent=11 // pred_fallthru
        _
      // Predicated region
      $region29: #{small_basic_block_forward.1} parent=11 // pred_check
        %p262 = pneg %p146
      $region30: #{small_basic_block_forward.1} parent=11 // pred_check_branch
        %264 = sbr.rel (%p262) target = $region32
      $region31: #{small_basic_block_forward.1} parent=11 // pred_region
        _
      $region32: #{small_basic_block_forward.1} parent=11 // pred_fallthru
        _
      // Predicated region
      $region33: #{small_basic_block_forward.1} parent=11 // pred_check
        %p265 = pneg %p167
      $region34: #{small_basic_block_forward.1} parent=11 // pred_check_branch
        %267 = sbr.rel (%p265) target = $region36
      $region35: #{small_basic_block_forward.1} parent=11 // pred_region
        _
      $region36: #{small_basic_block_forward.1} parent=11 // pred_fallthru
        _
      // Predicated region
      $region37: #{small_basic_block_forward.1} parent=11 // pred_check
        %p268 = pneg %p188
      $region38: #{small_basic_block_forward.1} parent=11 // pred_check_branch
        %270 = sbr.rel (%p268) target = $region40
      $region39: #{small_basic_block_forward.1} parent=11 // pred_region
        _
      $region40: #{small_basic_block_forward.1} parent=11 // pred_fallthru
        _
      // Predicated region
      $region41: #{small_basic_block_forward.1} parent=11 // pred_check
        %p271 = pneg %p209
      $region42: #{small_basic_block_forward.1} parent=11 // pred_check_branch
        %273 = sbr.rel (%p271) target = $region44
      $region43: #{small_basic_block_forward.1} parent=11 // pred_region
        _
      $region44: #{small_basic_block_forward.1} parent=11 // pred_fallthru
        _
    $region12: #{small_basic_block_forward.1} parent=5 // pred_fallthru
      _
    %p274 = scmp.lt.s32.totalorder %s15, 2
    // Predicated region
    $region45: #{small_basic_block_forward.1} parent=5 // pred_check
      %p275 = pneg %p274
    $region46: #{small_basic_block_forward.1} parent=5 // pred_check_branch
      %277 = sbr.rel (%p275) target = $region48
    $region47: #{small_basic_block_forward.1} parent=5 // pred_region
      // Predicated region
      $region49: #{small_basic_block_forward.1} parent=47 // pred_check
        %p278 = pneg %p35
      $region50: #{small_basic_block_forward.1} parent=47 // pred_check_branch
        %280 = sbr.rel (%p278) target = $region52
      $region51: #{small_basic_block_forward.1} parent=47 // pred_region
        %p281 = scmp.lt.s32.totalorder %s15, 1
        %s282 = scalar_select %p281, %s15, 1
        %s283 = smul.addr %s282, 16
        %s284 = smul.addr %s283, 8
        %s285 = scalar_lea.vmem %s0, %s284
      $region52: #{small_basic_block_forward.1} parent=47 // pred_fallthru
        _
    $region48: #{small_basic_block_forward.1} parent=5 // pred_fallthru
      _
    %p286 = scmp.le.s32.totalorder 1, %s15
    %p287 = scmp.lt.s32.totalorder %s15, 3
    %p288 = pnand %p286, %p287
    %p289 = pneg %p288
    // Predicated region
    $region53: #{small_basic_block_forward.1} parent=5 // pred_check
      _
    $region54: #{small_basic_block_forward.1} parent=5 // pred_check_branch
      %291 = sbr.rel (%p288) target = $region56
    $region55: #{small_basic_block_forward.1} parent=5 // pred_region
      %s292 = ssub.s32 %s15, 1
      %p293 = scmp.lt.s32.totalorder %s20, 1
      %s294 = scalar_select %p293, %s20, 1
      %s295 = smul.addr %s294, 16
      %s296 = smul.addr %s295, 8
      %s297 = scalar_lea.vmem %s0, %s296
      %p298 = pneg %p41
      %p299 = pneg %p38
      %p300 = pneg %p62
      %p301 = pneg %p59
      %p302 = pneg %p83
      %p303 = pneg %p80
      %p304 = pneg %p104
      %p305 = pneg %p101
      %p306 = pneg %p125
      %p307 = pneg %p122
      %p308 = pneg %p146
      %p309 = pneg %p143
      %p310 = pneg %p167
      %p311 = pneg %p164
      %p312 = pneg %p188
      %p313 = pneg %p185
      %p314 = pneg %p209
      %p315 = pneg %p206
      %p316 = pneg %p235
      %p317 = pneg %p232
      %p318 = scmp.lt.s32.totalorder %s20, 1
      %s319 = scalar_select %p318, %s20, 1
      %s320 = smul.addr %s319, 32
      %s321 = smul.addr %s320, 8
      %s322 = scalar_lea.vmem %s9, %s321
      %p323 = scmp.lt.s32.totalorder %s20, 1
      %s324 = scalar_select %p323, %s20, 1
      %s325 = smul.addr %s324, 16
      %s326 = smul.addr %s325, 8
      %s327 = scalar_lea.vmem %s0, %s326
      %p328 = scmp.lt.s32.totalorder %s20, 1
      %s329 = scalar_select %p328, %s20, 1
      %s330 = smul.addr %s329, 32
      %s331 = smul.addr %s330, 8
      %s332 = scalar_lea.vmem %s9, %s331
      %v334 = vld [vmem:[%s1] sm:$0xf]
      %v335 = vld [vmem:[%s1 + $0x4] sm:$0xf]
      %v336 = vld [vmem:[%s1 + $0x8] sm:$0xf]
      %v337 = vld [vmem:[%s1 + $0xc] sm:$0xf]
      %v338 = vld [vmem:[%s3] sm:$0xf]
      %v339 = vld [vmem:[%s3 + $0x4] sm:$0xf]
      %v340 = vld [vmem:[%s3 + $0x8] sm:$0xf]
      %v341 = vld [vmem:[%s3 + $0xc] sm:$0xf]
      %v342 = vld [vmem:[%s5] sm:$0xf]
      %v343 = vld [vmem:[%s5 + $0x4] sm:$0xf]
      %v344 = vld [vmem:[%s5 + $0x8] sm:$0xf]
      %v345 = vld [vmem:[%s5 + $0xc] sm:$0xf]
      %v346 = vld [vmem:[%s7] sm:$0xf]
      %v347 = vld [vmem:[%s7 + $0x4] sm:$0xf]
      %v348 = vld [vmem:[%s7 + $0x8] sm:$0xf]
      %v349 = vld [vmem:[%s7 + $0xc] sm:$0xf]
      %v350 = vld [vmem:[%s7 + $0x10] sm:$0xf]
      %v351 = vld [vmem:[%s7 + $0x14] sm:$0xf]
      %v352 = vld [vmem:[%s7 + $0x18] sm:$0xf]
      %v353 = vld [vmem:[%s7 + $0x1c] sm:$0xf]
      %v354 = vld [vmem:[%s7 + $0x20] sm:$0xf]
      %v355 = vld [vmem:[%s7 + $0x24] sm:$0xf]
      %v356 = vld [vmem:[%s7 + $0x28] sm:$0xf]
      %v357 = vld [vmem:[%s7 + $0x2c] sm:$0xf]
      %v358 = vld [vmem:[%s7 + $0x30] sm:$0xf]
      %v359 = vld [vmem:[%s7 + $0x34] sm:$0xf]
      %v360 = vld [vmem:[%s7 + $0x38] sm:$0xf]
      %v361 = vld [vmem:[%s7 + $0x3c] sm:$0xf]
      %v362 = vld [vmem:[%s2] sm:$0xff]
      %v363 = vld [vmem:[%s2 + $0x8] sm:$0xff]
      %v364 = vld [vmem:[%s2 + $0x10] sm:$0xff]
      %v365 = vld [vmem:[%s2 + $0x18] sm:$0xff]
      %v366 = vld [vmem:[%s4] sm:$0xff]
      %v367 = vld [vmem:[%s4 + $0x8] sm:$0xff]
      %v368 = vld [vmem:[%s4 + $0x10] sm:$0xff]
      %v369 = vld [vmem:[%s4 + $0x18] sm:$0xff]
      %v370 = vld [vmem:[%s6] sm:$0xff]
      %v371 = vld [vmem:[%s6 + $0x8] sm:$0xff]
      %v372 = vld [vmem:[%s6 + $0x10] sm:$0xff]
      %v373 = vld [vmem:[%s6 + $0x18] sm:$0xff]
      %v374 = vld [vmem:[%s8] sm:$0xff]
      %v375 = vld [vmem:[%s8 + $0x8] sm:$0xff]
      %v376 = vld [vmem:[%s8 + $0x10] sm:$0xff]
      %v377 = vld [vmem:[%s8 + $0x18] sm:$0xff]
      %v378 = vld [vmem:[%s8 + $0x20] sm:$0xff]
      %v379 = vld [vmem:[%s8 + $0x28] sm:$0xff]
      %v380 = vld [vmem:[%s8 + $0x30] sm:$0xff]
      %v381 = vld [vmem:[%s8 + $0x38] sm:$0xff]
      %v382 = vld [vmem:[%s8 + $0x40] sm:$0xff]
      %v383 = vld [vmem:[%s8 + $0x48] sm:$0xff]
      %v384 = vld [vmem:[%s8 + $0x50] sm:$0xff]
      %v385 = vld [vmem:[%s8 + $0x58] sm:$0xff]
      %v386 = vld [vmem:[%s8 + $0x60] sm:$0xff]
      %v387 = vld [vmem:[%s8 + $0x68] sm:$0xff]
      %v388 = vld [vmem:[%s8 + $0x70] sm:$0xff]
      %v389 = vld [vmem:[%s8 + $0x78] sm:$0xff]
      %v390 = vlaneseq
      %v391 = vand.u32 %v390, 127
      %v392 = vadd.s32 %v391, 128
      %vm393 = vcmp.lt.s32.totalorder %v391, 0
      %v394 = vsub.s32 0, %v391
      %v395 = vsel %vm393, %v394, %v391
      %v396 = vshrl.u32 %v395, 4
      %v397 = vand.u32 %v395, 15
      %v398 = vsub.s32 0, %v397
      %v399 = vsel %vm393, %v398, %v397
      %vm400 = vcmp.lt.s32.totalorder %v392, 0
      %v401 = vsub.s32 0, %v392
      %v402 = vsel %vm400, %v401, %v392
      %v403 = vshrl.u32 %v402, 4
      %v404 = vand.u32 %v402, 15
      %v405 = vsub.s32 0, %v404
      %v406 = vsel %vm400, %v405, %v404
      %vm407 = vcmp.ne.s32.totalorder %v399, 0
      %vm408 = vcmp.ne.s32.totalorder %v406, 0
      %vm409 = vcmp.lt.s32.totalorder %v399, 0
      %vm410 = vcmp.lt.s32.totalorder %v406, 0
      %vm411 = vmand %vm409, %vm407
      %vm412 = vmand %vm410, %vm408
      %v413 = vadd.s32 %v399, 16
      %v414 = vadd.s32 %v406, 16
      %v415 = vsel %vm411, %v413, %v399
      %v416 = vsel %vm412, %v414, %v406
      %vm417 = vcmp.ge.s32.totalorder %v391, 16
      %vm418 = vcmp.ge.s32.totalorder %v392, 16
      %vm419 = vcmp.lt.s32.totalorder %v391, 240
      %vm420 = vcmp.lt.s32.totalorder %v392, 240
      %vm421 = vcmp.gt.s32.totalorder %v415, 0
      %vm422 = vcmp.gt.s32.totalorder %v416, 0
      %vm423 = vcmp.lt.s32.totalorder %v415, 15
      %vm424 = vcmp.lt.s32.totalorder %v416, 15
      %v425 = vld [vmem:[%s327] sm:$0xff]
      %v426 = vld [vmem:[%s327 + $0x8] sm:$0xff]
      %v427 = vld [vmem:[%s327 + $0x10] sm:$0xff]
      %v428 = vld [vmem:[%s327 + $0x18] sm:$0xff]
      %v429 = vld [vmem:[%s327 + $0x20] sm:$0xff]
      %v430 = vld [vmem:[%s327 + $0x28] sm:$0xff]
      %v431 = vld [vmem:[%s327 + $0x30] sm:$0xff]
      %v432 = vld [vmem:[%s327 + $0x38] sm:$0xff]
      %v433 = vld [vmem:[%s327 + $0x40] sm:$0xff]
      %v434 = vld [vmem:[%s327 + $0x48] sm:$0xff]
      %v435 = vld [vmem:[%s327 + $0x50] sm:$0xff]
      %v436 = vld [vmem:[%s327 + $0x58] sm:$0xff]
      %v437 = vld [vmem:[%s327 + $0x60] sm:$0xff]
      %v438 = vld [vmem:[%s327 + $0x68] sm:$0xff]
      %v439 = vld [vmem:[%s327 + $0x70] sm:$0xff]
      %v440 = vld [vmem:[%s327 + $0x78] sm:$0xff]
      %v441 = vpack.c.bf16 %v427, %v425
      %v442 = vpack.c.bf16 %v428, %v426
      %v443 = vpack.c.bf16 %v431, %v429
      %v444 = vpack.c.bf16 %v432, %v430
      %v445 = vpack.c.bf16 %v435, %v433
      %v446 = vpack.c.bf16 %v436, %v434
      %v447 = vpack.c.bf16 %v439, %v437
      %v448 = vpack.c.bf16 %v440, %v438
      %450 = vset.pattern.permute.xlu0 0
      %451 = vperm.xlu0 %450, %v362
      %v452 = vpop.permute.xlu0 %451
      %455 = vset.pattern.permute.xlu0 0
      %456 = vperm.xlu0 %455, %v363
      %v457 = vpop.permute.xlu0 %456
      %460 = vset.pattern.permute.xlu0 0
      %461 = vperm.xlu0 %460, %v364
      %v462 = vpop.permute.xlu0 %461
      %465 = vset.pattern.permute.xlu0 0
      %466 = vperm.xlu0 %465, %v365
      %v467 = vpop.permute.xlu0 %466
      %v473 = vunpack.c.l.b16 %v334
      %v474 = vunpack.c.l.b16 %v335
      %v475 = vunpack.c.l.b16 %v336
      %v476 = vunpack.c.l.b16 %v337
      %v477 = vpack.c.b16 %v474, %v473
      %v478 = vpack.c.b16 %v476, %v475
      %vm479 = vcmask 523264
      %v481 = vsel %vm479, %v477, 0
      %v484 = vsel %vm479, %v478, 0
      %486 = vmatprep.subr.bf16.mxu0 %v442
      %487 = vmatpush1.bf16.msra.mxu0 %v441
      %488 = vmatprep.subr.bf16.mxu0 %v444
      %489 = vmatpush1.bf16.msra.mxu0 %v443
      %490 = vmatprep.subr.bf16.mxu0 %v446
      %491 = vmatpush1.bf16.msra.mxu0 %v445
      %492 = vmatprep.subr.bf16.mxu0 %v448
      %493 = vmatpush1.bf16.msra.mxu0 %v447
      %494 = vmatprep.subr.bf16.mxu0 0
      %495 = vmatpush1.bf16.msra.mxu0 0
      %496 = vmatprep.subr.bf16.mxu0 0
      %497 = vmatpush1.bf16.msra.mxu0 0
      %498 = vmatprep.subr.bf16.mxu0 0
      %499 = vmatpush1.bf16.msra.mxu0 0
      %500 = vmatprep.subr.bf16.mxu0 0
      %501 = vmatpush1.bf16.msra.mxu0 0
      %502 = vmatprep.subr.bf16.mxu0 0
      %503 = vmatpush1.bf16.msra.mxu0 0
      %504 = vmatprep.subr.bf16.mxu0 0
      %505 = vmatpush1.bf16.msra.mxu0 0
      %506 = vmatprep.subr.bf16.mxu0 0
      %507 = vmatpush1.bf16.msra.mxu0 0
      %508 = vmatprep.subr.bf16.mxu0 0
      %509 = vmatpush1.bf16.msra.mxu0 0
      %510 = vmatprep.subr.bf16.mxu0 0
      %511 = vmatpush1.bf16.msra.mxu0 0
      %512 = vmatprep.subr.bf16.mxu0 0
      %513 = vmatpush1.bf16.msra.mxu0 0
      %514 = vmatprep.subr.bf16.mxu0 0
      %515 = vmatpush1.bf16.msra.mxu0 0
      %516 = vmatprep.subr.bf16.mxu0 0
      %517 = vmatpush1.bf16.msra.mxu0 0
      %518 = vmatprep.mubr.bf16.mxu0 0
      %519 = vmatmul.mubr.bf16.gmra.mrb[0].mxu0 %v481
      %v520 = vpop.f32.mrb[0].mxu0
      %v521 = vadd.f32 %v452, %v520
      %v522 = vpop.f32.mrb[0].mxu0
      %v523 = vadd.f32 %v452, %v522
      %v524 = vpop.f32.mrb[0].mxu0
      %v525 = vadd.f32 %v457, %v524
      %v526 = vpop.f32.mrb[0].mxu0
      %v527 = vadd.f32 %v457, %v526
      %528 = vmatprep.mubr.bf16.mxu0 0
      %529 = vmatmul.mubr.bf16.gmra.mrb[0].mxu0 %v484
      %v530 = vpop.f32.mrb[0].mxu0
      %v531 = vadd.f32 %v462, %v530
      %v532 = vpop.f32.mrb[0].mxu0
      %v533 = vadd.f32 %v462, %v532
      %v534 = vpop.f32.mrb[0].mxu0
      %v535 = vadd.f32 %v467, %v534
      %v536 = vpop.f32.mrb[0].mxu0
      %v537 = vadd.f32 %v467, %v536
      %538 = vdwg.mxu0
      %v539 = vmax.f32 %v521, 0.0
      %v540 = vmax.f32 %v523, 0.0
      %v541 = vmax.f32 %v525, 0.0
      %v542 = vmax.f32 %v527, 0.0
      %v543 = vmax.f32 %v531, 0.0
      %v544 = vmax.f32 %v533, 0.0
      %v545 = vmax.f32 %v535, 0.0
      %v546 = vmax.f32 %v537, 0.0
      %547 = vrot.lane.b32.xlu0 %v539, 16
      %v548 = vpop.permute.xlu0 %547
      %549 = vrot.lane.b32.xlu0 %v541, 16
      %v550 = vpop.permute.xlu0 %549
      %551 = vrot.lane.b32.xlu0 %v543, 16
      %v552 = vpop.permute.xlu0 %551
      %553 = vrot.lane.b32.xlu0 %v545, 16
      %v554 = vpop.permute.xlu0 %553
      %555 = vrot.lane.b32.xlu0 %v540, 16
      %v556 = vpop.permute.xlu0 %555
      %557 = vrot.lane.b32.xlu0 %v542, 16
      %v558 = vpop.permute.xlu0 %557
      %559 = vrot.lane.b32.xlu0 %v544, 16
      %v560 = vpop.permute.xlu0 %559
      %561 = vrot.lane.b32.xlu0 %v546, 16
      %v562 = vpop.permute.xlu0 %561
      %vm563 = vcmp.lt.s32.totalorder %v391, 16
      %v564 = vsel %vm563, %v548, %v556
      %v565 = vsel %vm563, %v550, %v558
      %v566 = vsel %vm563, %v552, %v560
      %v567 = vsel %vm563, %v554, %v562
      %v568 = vsel %vm563, %v556, %v548
      %v569 = vsel %vm563, %v558, %v550
      %v570 = vsel %vm563, %v560, %v552
      %v571 = vsel %vm563, %v562, %v554
      %v572 = vsel %vm417, %v568, 0.0
      %v573 = vsel %vm418, %v564, 0.0
      %v574 = vsel %vm417, %v569, 0.0
      %v575 = vsel %vm418, %v565, 0.0
      %v576 = vsel %vm417, %v570, 0.0
      %v577 = vsel %vm418, %v566, 0.0
      %v578 = vsel %vm417, %v571, 0.0
      %v579 = vsel %vm418, %v567, 0.0
      %580 = vrot.lane.b32.xlu0 %v539, 112
      %v581 = vpop.permute.xlu0 %580
      %582 = vrot.lane.b32.xlu0 %v541, 112
      %v583 = vpop.permute.xlu0 %582
      %584 = vrot.lane.b32.xlu0 %v543, 112
      %v585 = vpop.permute.xlu0 %584
      %586 = vrot.lane.b32.xlu0 %v545, 112
      %v587 = vpop.permute.xlu0 %586
      %588 = vrot.lane.b32.xlu0 %v540, 112
      %v589 = vpop.permute.xlu0 %588
      %590 = vrot.lane.b32.xlu0 %v542, 112
      %v591 = vpop.permute.xlu0 %590
      %592 = vrot.lane.b32.xlu0 %v544, 112
      %v593 = vpop.permute.xlu0 %592
      %594 = vrot.lane.b32.xlu0 %v546, 112
      %v595 = vpop.permute.xlu0 %594
      %vm596 = vcmp.lt.s32.totalorder %v391, 112
      %v597 = vsel %vm596, %v581, %v589
      %v598 = vsel %vm596, %v583, %v591
      %v599 = vsel %vm596, %v585, %v593
      %v600 = vsel %vm596, %v587, %v595
      %v601 = vsel %vm596, %v589, %v581
      %v602 = vsel %vm596, %v591, %v583
      %v603 = vsel %vm596, %v593, %v585
      %v604 = vsel %vm596, %v595, %v587
      %v605 = vsel %vm419, %v597, 0.0
      %v606 = vsel %vm420, %v601, 0.0
      %v607 = vsel %vm419, %v598, 0.0
      %v608 = vsel %vm420, %v602, 0.0
      %v609 = vsel %vm419, %v599, 0.0
      %v610 = vsel %vm420, %v603, 0.0
      %v611 = vsel %vm419, %v600, 0.0
      %v612 = vsel %vm420, %v604, 0.0
      %v613 = vpack.c.bf16 %v574, %v572
      %v614 = vpack.c.bf16 %v575, %v573
      %v615 = vpack.c.bf16 %v578, %v576
      %v616 = vpack.c.bf16 %v579, %v577
      %v617 = vpack.c.bf16 %v541, %v539
      %v618 = vpack.c.bf16 %v542, %v540
      %v619 = vpack.c.bf16 %v545, %v543
      %v620 = vpack.c.bf16 %v546, %v544
      %v621 = vpack.c.bf16 %v607, %v605
      %v622 = vpack.c.bf16 %v608, %v606
      %v623 = vpack.c.bf16 %v611, %v609
      %v624 = vpack.c.bf16 %v612, %v610
      %626 = vset.pattern.permute.xlu0 0
      %627 = vperm.xlu0 %626, %v366
      %v628 = vpop.permute.xlu0 %627
      %631 = vset.pattern.permute.xlu0 0
      %632 = vperm.xlu0 %631, %v367
      %v633 = vpop.permute.xlu0 %632
      %636 = vset.pattern.permute.xlu0 0
      %637 = vperm.xlu0 %636, %v368
      %v638 = vpop.permute.xlu0 %637
      %641 = vset.pattern.permute.xlu0 0
      %642 = vperm.xlu0 %641, %v369
      %v643 = vpop.permute.xlu0 %642
      %v649 = vunpack.c.l.b16 %v338
      %v650 = vunpack.c.l.b16 %v339
      %v651 = vunpack.c.l.b16 %v340
      %v652 = vunpack.c.l.b16 %v341
      %v653 = vpack.c.b16 %v650, %v649
      %v654 = vpack.c.b16 %v652, %v651
      %vm655 = vcmask 785408
      %v657 = vsel %vm655, %v653, 0
      %v660 = vsel %vm655, %v654, 0
      %662 = vmatprep.subr.bf16.mxu0 %v614
      %663 = vmatpush1.bf16.msra.mxu0 %v613
      %664 = vmatprep.subr.bf16.mxu0 %v616
      %665 = vmatpush1.bf16.msra.mxu0 %v615
      %666 = vmatprep.subr.bf16.mxu0 %v618
      %667 = vmatpush1.bf16.msra.mxu0 %v617
      %668 = vmatprep.subr.bf16.mxu0 %v620
      %669 = vmatpush1.bf16.msra.mxu0 %v619
      %670 = vmatprep.subr.bf16.mxu0 %v622
      %671 = vmatpush1.bf16.msra.mxu0 %v621
      %672 = vmatprep.subr.bf16.mxu0 %v624
      %673 = vmatpush1.bf16.msra.mxu0 %v623
      %674 = vmatprep.subr.bf16.mxu0 0
      %675 = vmatpush1.bf16.msra.mxu0 0
      %676 = vmatprep.subr.bf16.mxu0 0
      %677 = vmatpush1.bf16.msra.mxu0 0
      %678 = vmatprep.subr.bf16.mxu0 0
      %679 = vmatpush1.bf16.msra.mxu0 0
      %680 = vmatprep.subr.bf16.mxu0 0
      %681 = vmatpush1.bf16.msra.mxu0 0
      %682 = vmatprep.subr.bf16.mxu0 0
      %683 = vmatpush1.bf16.msra.mxu0 0
      %684 = vmatprep.subr.bf16.mxu0 0
      %685 = vmatpush1.bf16.msra.mxu0 0
      %686 = vmatprep.subr.bf16.mxu0 0
      %687 = vmatpush1.bf16.msra.mxu0 0
      %688 = vmatprep.subr.bf16.mxu0 0
      %689 = vmatpush1.bf16.msra.mxu0 0
      %690 = vmatprep.subr.bf16.mxu0 0
      %691 = vmatpush1.bf16.msra.mxu0 0
      %692 = vmatprep.subr.bf16.mxu0 0
      %693 = vmatpush1.bf16.msra.mxu0 0
      %694 = vmatprep.mubr.bf16.mxu0 0
      %695 = vmatmul.mubr.bf16.gmra.mrb[0].mxu0 %v657
      %v696 = vpop.f32.mrb[0].mxu0
      %v697 = vadd.f32 %v628, %v696
      %v698 = vpop.f32.mrb[0].mxu0
      %v699 = vadd.f32 %v628, %v698
      %v700 = vpop.f32.mrb[0].mxu0
      %v701 = vadd.f32 %v633, %v700
      %v702 = vpop.f32.mrb[0].mxu0
      %v703 = vadd.f32 %v633, %v702
      %704 = vmatprep.mubr.bf16.mxu0 0
      %705 = vmatmul.mubr.bf16.gmra.mrb[0].mxu0 %v660
      %v706 = vpop.f32.mrb[0].mxu0
      %v707 = vadd.f32 %v638, %v706
      %v708 = vpop.f32.mrb[0].mxu0
      %v709 = vadd.f32 %v638, %v708
      %v710 = vpop.f32.mrb[0].mxu0
      %v711 = vadd.f32 %v643, %v710
      %v712 = vpop.f32.mrb[0].mxu0
      %v713 = vadd.f32 %v643, %v712
      %714 = vdwg.mxu0
      %v715 = vmax.f32 %v697, 0.0
      %v716 = vmax.f32 %v699, 0.0
      %v717 = vmax.f32 %v701, 0.0
      %v718 = vmax.f32 %v703, 0.0
      %v719 = vmax.f32 %v707, 0.0
      %v720 = vmax.f32 %v709, 0.0
      %v721 = vmax.f32 %v711, 0.0
      %v722 = vmax.f32 %v713, 0.0
      %723 = vrot.lane.b32.xlu0 %v715, 1
      %v724 = vpop.permute.xlu0 %723
      %725 = vrot.lane.b32.xlu0 %v717, 1
      %v726 = vpop.permute.xlu0 %725
      %727 = vrot.lane.b32.xlu0 %v719, 1
      %v728 = vpop.permute.xlu0 %727
      %729 = vrot.lane.b32.xlu0 %v721, 1
      %v730 = vpop.permute.xlu0 %729
      %731 = vrot.lane.b32.xlu0 %v716, 1
      %v732 = vpop.permute.xlu0 %731
      %733 = vrot.lane.b32.xlu0 %v718, 1
      %v734 = vpop.permute.xlu0 %733
      %735 = vrot.lane.b32.xlu0 %v720, 1
      %v736 = vpop.permute.xlu0 %735
      %737 = vrot.lane.b32.xlu0 %v722, 1
      %v738 = vpop.permute.xlu0 %737
      %vm739 = vcmp.lt.s32.totalorder %v391, 1
      %v740 = vsel %vm739, %v724, %v732
      %v741 = vsel %vm739, %v726, %v734
      %v742 = vsel %vm739, %v728, %v736
      %v743 = vsel %vm739, %v730, %v738
      %v744 = vsel %vm739, %v732, %v724
      %v745 = vsel %vm739, %v734, %v726
      %v746 = vsel %vm739, %v736, %v728
      %v747 = vsel %vm739, %v738, %v730
      %v748 = vsel %vm421, %v744, 0.0
      %v749 = vsel %vm422, %v740, 0.0
      %v750 = vsel %vm421, %v745, 0.0
      %v751 = vsel %vm422, %v741, 0.0
      %v752 = vsel %vm421, %v746, 0.0
      %v753 = vsel %vm422, %v742, 0.0
      %v754 = vsel %vm421, %v747, 0.0
      %v755 = vsel %vm422, %v743, 0.0
      %756 = vrot.lane.b32.xlu0 %v715, 127
      %v757 = vpop.permute.xlu0 %756
      %758 = vrot.lane.b32.xlu0 %v717, 127
      %v759 = vpop.permute.xlu0 %758
      %760 = vrot.lane.b32.xlu0 %v719, 127
      %v761 = vpop.permute.xlu0 %760
      %762 = vrot.lane.b32.xlu0 %v721, 127
      %v763 = vpop.permute.xlu0 %762
      %764 = vrot.lane.b32.xlu0 %v716, 127
      %v765 = vpop.permute.xlu0 %764
      %766 = vrot.lane.b32.xlu0 %v718, 127
      %v767 = vpop.permute.xlu0 %766
      %768 = vrot.lane.b32.xlu0 %v720, 127
      %v769 = vpop.permute.xlu0 %768
      %770 = vrot.lane.b32.xlu0 %v722, 127
      %v771 = vpop.permute.xlu0 %770
      %vm772 = vcmp.lt.s32.totalorder %v391, 127
      %v773 = vsel %vm772, %v757, %v765
      %v774 = vsel %vm772, %v759, %v767
      %v775 = vsel %vm772, %v761, %v769
      %v776 = vsel %vm772, %v763, %v771
      %v777 = vsel %vm772, %v765, %v757
      %v778 = vsel %vm772, %v767, %v759
      %v779 = vsel %vm772, %v769, %v761
      %v780 = vsel %vm772, %v771, %v763
      %v781 = vsel %vm423, %v773, 0.0
      %v782 = vsel %vm424, %v777, 0.0
      %v783 = vsel %vm423, %v774, 0.0
      %v784 = vsel %vm424, %v778, 0.0
      %v785 = vsel %vm423, %v775, 0.0
      %v786 = vsel %vm424, %v779, 0.0
      %v787 = vsel %vm423, %v776, 0.0
      %v788 = vsel %vm424, %v780, 0.0
      %v789 = vpack.c.bf16 %v750, %v748
      %v790 = vpack.c.bf16 %v751, %v749
      %v791 = vpack.c.bf16 %v754, %v752
      %v792 = vpack.c.bf16 %v755, %v753
      %v793 = vpack.c.bf16 %v717, %v715
      %v794 = vpack.c.bf16 %v718, %v716
      %v795 = vpack.c.bf16 %v721, %v719
      %v796 = vpack.c.bf16 %v722, %v720
      %v797 = vpack.c.bf16 %v783, %v781
      %v798 = vpack.c.bf16 %v784, %v782
      %v799 = vpack.c.bf16 %v787, %v785
      %v800 = vpack.c.bf16 %v788, %v786
      %802 = vset.pattern.permute.xlu0 0
      %803 = vperm.xlu0 %802, %v370
      %v804 = vpop.permute.xlu0 %803
      %807 = vset.pattern.permute.xlu0 0
      %808 = vperm.xlu0 %807, %v371
      %v809 = vpop.permute.xlu0 %808
      %812 = vset.pattern.permute.xlu0 0
      %813 = vperm.xlu0 %812, %v372
      %v814 = vpop.permute.xlu0 %813
      %817 = vset.pattern.permute.xlu0 0
      %818 = vperm.xlu0 %817, %v373
      %v819 = vpop.permute.xlu0 %818
      %v825 = vunpack.c.l.b16 %v342
      %v826 = vunpack.c.l.b16 %v343
      %v827 = vunpack.c.l.b16 %v344
      %v828 = vunpack.c.l.b16 %v345
      %v829 = vpack.c.b16 %v826, %v825
      %v830 = vpack.c.b16 %v828, %v827
      %v832 = vsel %vm655, %v829, 0
      %v835 = vsel %vm655, %v830, 0
      %837 = vmatprep.subr.bf16.mxu0 %v790
      %838 = vmatpush1.bf16.msra.mxu0 %v789
      %839 = vmatprep.subr.bf16.mxu0 %v792
      %840 = vmatpush1.bf16.msra.mxu0 %v791
      %841 = vmatprep.subr.bf16.mxu0 %v794
      %842 = vmatpush1.bf16.msra.mxu0 %v793
      %843 = vmatprep.subr.bf16.mxu0 %v796
      %844 = vmatpush1.bf16.msra.mxu0 %v795
      %845 = vmatprep.subr.bf16.mxu0 %v798
      %846 = vmatpush1.bf16.msra.mxu0 %v797
      %847 = vmatprep.subr.bf16.mxu0 %v800
      %848 = vmatpush1.bf16.msra.mxu0 %v799
      %849 = vmatprep.subr.bf16.mxu0 0
      %850 = vmatpush1.bf16.msra.mxu0 0
      %851 = vmatprep.subr.bf16.mxu0 0
      %852 = vmatpush1.bf16.msra.mxu0 0
      %853 = vmatprep.subr.bf16.mxu0 0
      %854 = vmatpush1.bf16.msra.mxu0 0
      %855 = vmatprep.subr.bf16.mxu0 0
      %856 = vmatpush1.bf16.msra.mxu0 0
      %857 = vmatprep.subr.bf16.mxu0 0
      %858 = vmatpush1.bf16.msra.mxu0 0
      %859 = vmatprep.subr.bf16.mxu0 0
      %860 = vmatpush1.bf16.msra.mxu0 0
      %861 = vmatprep.subr.bf16.mxu0 0
      %862 = vmatpush1.bf16.msra.mxu0 0
      %863 = vmatprep.subr.bf16.mxu0 0
      %864 = vmatpush1.bf16.msra.mxu0 0
      %865 = vmatprep.subr.bf16.mxu0 0
      %866 = vmatpush1.bf16.msra.mxu0 0
      %867 = vmatprep.subr.bf16.mxu0 0
      %868 = vmatpush1.bf16.msra.mxu0 0
      %869 = vmatprep.mubr.bf16.mxu0 0
      %870 = vmatmul.mubr.bf16.gmra.mrb[0].mxu0 %v832
      %v871 = vpop.f32.mrb[0].mxu0
      %v872 = vadd.f32 %v804, %v871
      %v873 = vpop.f32.mrb[0].mxu0
      %v874 = vadd.f32 %v804, %v873
      %v875 = vpop.f32.mrb[0].mxu0
      %v876 = vadd.f32 %v809, %v875
      %v877 = vpop.f32.mrb[0].mxu0
      %v878 = vadd.f32 %v809, %v877
      %879 = vmatprep.mubr.bf16.mxu0 0
      %880 = vmatmul.mubr.bf16.gmra.mrb[0].mxu0 %v835
      %v881 = vpop.f32.mrb[0].mxu0
      %v882 = vadd.f32 %v814, %v881
      %v883 = vpop.f32.mrb[0].mxu0
      %v884 = vadd.f32 %v814, %v883
      %v885 = vpop.f32.mrb[0].mxu0
      %v886 = vadd.f32 %v819, %v885
      %v887 = vpop.f32.mrb[0].mxu0
      %v888 = vadd.f32 %v819, %v887
      %889 = vdwg.mxu0
      %v890 = vmax.f32 %v872, 0.0
      %v891 = vmax.f32 %v874, 0.0
      %v892 = vmax.f32 %v876, 0.0
      %v893 = vmax.f32 %v878, 0.0
      %v894 = vmax.f32 %v882, 0.0
      %v895 = vmax.f32 %v884, 0.0
      %v896 = vmax.f32 %v886, 0.0
      %v897 = vmax.f32 %v888, 0.0
      %v898 = vpack.c.bf16 %v892, %v890
      %v899 = vpack.c.bf16 %v893, %v891
      %v900 = vpack.c.bf16 %v896, %v894
      %v901 = vpack.c.bf16 %v897, %v895
      %903 = vset.pattern.permute.xlu0 0
      %904 = vperm.xlu0 %903, %v374
      %v905 = vpop.permute.xlu0 %904
      %908 = vset.pattern.permute.xlu0 0
      %909 = vperm.xlu0 %908, %v375
      %v910 = vpop.permute.xlu0 %909
      %913 = vset.pattern.permute.xlu0 0
      %914 = vperm.xlu0 %913, %v376
      %v915 = vpop.permute.xlu0 %914
      %918 = vset.pattern.permute.xlu0 0
      %919 = vperm.xlu0 %918, %v377
      %v920 = vpop.permute.xlu0 %919
      %923 = vset.pattern.permute.xlu0 0
      %924 = vperm.xlu0 %923, %v378
      %v925 = vpop.permute.xlu0 %924
      %928 = vset.pattern.permute.xlu0 0
      %929 = vperm.xlu0 %928, %v379
      %v930 = vpop.permute.xlu0 %929
      %933 = vset.pattern.permute.xlu0 0
      %934 = vperm.xlu0 %933, %v380
      %v935 = vpop.permute.xlu0 %934
      %938 = vset.pattern.permute.xlu0 0
      %939 = vperm.xlu0 %938, %v381
      %v940 = vpop.permute.xlu0 %939
      %943 = vset.pattern.permute.xlu0 0
      %944 = vperm.xlu0 %943, %v382
      %v945 = vpop.permute.xlu0 %944
      %948 = vset.pattern.permute.xlu0 0
      %949 = vperm.xlu0 %948, %v383
      %v950 = vpop.permute.xlu0 %949
      %953 = vset.pattern.permute.xlu0 0
      %954 = vperm.xlu0 %953, %v384
      %v955 = vpop.permute.xlu0 %954
      %958 = vset.pattern.permute.xlu0 0
      %959 = vperm.xlu0 %958, %v385
      %v960 = vpop.permute.xlu0 %959
      %963 = vset.pattern.permute.xlu0 0
      %964 = vperm.xlu0 %963, %v386
      %v965 = vpop.permute.xlu0 %964
      %968 = vset.pattern.permute.xlu0 0
      %969 = vperm.xlu0 %968, %v387
      %v970 = vpop.permute.xlu0 %969
      %973 = vset.pattern.permute.xlu0 0
      %974 = vperm.xlu0 %973, %v388
      %v975 = vpop.permute.xlu0 %974
      %978 = vset.pattern.permute.xlu0 0
      %979 = vperm.xlu0 %978, %v389
      %v980 = vpop.permute.xlu0 %979
      %v998 = vunpack.c.l.b16 %v346
      %v999 = vunpack.c.l.b16 %v347
      %v1000 = vunpack.c.l.b16 %v348
      %v1001 = vunpack.c.l.b16 %v349
      %v1002 = vunpack.c.l.b16 %v350
      %v1003 = vunpack.c.l.b16 %v351
      %v1004 = vunpack.c.l.b16 %v352
      %v1005 = vunpack.c.l.b16 %v353
      %v1006 = vunpack.c.l.b16 %v354
      %v1007 = vunpack.c.l.b16 %v355
      %v1008 = vunpack.c.l.b16 %v356
      %v1009 = vunpack.c.l.b16 %v357
      %v1010 = vunpack.c.l.b16 %v358
      %v1011 = vunpack.c.l.b16 %v359
      %v1012 = vunpack.c.l.b16 %v360
      %v1013 = vunpack.c.l.b16 %v361
      %v1014 = vpack.c.b16 %v999, %v998
      %v1015 = vpack.c.b16 %v1001, %v1000
      %v1016 = vpack.c.b16 %v1003, %v1002
      %v1017 = vpack.c.b16 %v1005, %v1004
      %v1018 = vpack.c.b16 %v1007, %v1006
      %v1019 = vpack.c.b16 %v1009, %v1008
      %v1020 = vpack.c.b16 %v1011, %v1010
      %v1021 = vpack.c.b16 %v1013, %v1012
      %vm1022 = vcmask 261120
      %v1024 = vsel %vm1022, %v1014, 0
      %v1027 = vsel %vm1022, %v1015, 0
      %v1030 = vsel %vm1022, %v1016, 0
      %v1033 = vsel %vm1022, %v1017, 0
      %v1036 = vsel %vm1022, %v1018, 0
      %v1039 = vsel %vm1022, %v1019, 0
      %v1042 = vsel %vm1022, %v1020, 0
      %v1045 = vsel %vm1022, %v1021, 0
      %1047 = vmatprep.subr.bf16.mxu0 %v899
      %1048 = vmatpush1.bf16.msra.mxu0 %v898
      %1049 = vmatprep.subr.bf16.mxu0 %v901
      %1050 = vmatpush1.bf16.msra.mxu0 %v900
      %1051 = vmatprep.subr.bf16.mxu0 0
      %1052 = vmatpush1.bf16.msra.mxu0 0
      %1053 = vmatprep.subr.bf16.mxu0 0
      %1054 = vmatpush1.bf16.msra.mxu0 0
      %1055 = vmatprep.subr.bf16.mxu0 0
      %1056 = vmatpush1.bf16.msra.mxu0 0
      %1057 = vmatprep.subr.bf16.mxu0 0
      %1058 = vmatpush1.bf16.msra.mxu0 0
      %1059 = vmatprep.subr.bf16.mxu0 0
      %1060 = vmatpush1.bf16.msra.mxu0 0
      %1061 = vmatprep.subr.bf16.mxu0 0
      %1062 = vmatpush1.bf16.msra.mxu0 0
      %1063 = vmatprep.subr.bf16.mxu0 0
      %1064 = vmatpush1.bf16.msra.mxu0 0
      %1065 = vmatprep.subr.bf16.mxu0 0
      %1066 = vmatpush1.bf16.msra.mxu0 0
      %1067 = vmatprep.subr.bf16.mxu0 0
      %1068 = vmatpush1.bf16.msra.mxu0 0
      %1069 = vmatprep.subr.bf16.mxu0 0
      %1070 = vmatpush1.bf16.msra.mxu0 0
      %1071 = vmatprep.subr.bf16.mxu0 0
      %1072 = vmatpush1.bf16.msra.mxu0 0
      %1073 = vmatprep.subr.bf16.mxu0 0
      %1074 = vmatpush1.bf16.msra.mxu0 0
      %1075 = vmatprep.subr.bf16.mxu0 0
      %1076 = vmatpush1.bf16.msra.mxu0 0
      %1077 = vmatprep.subr.bf16.mxu0 0
      %1078 = vmatpush1.bf16.msra.mxu0 0
      %1079 = vmatprep.mubr.bf16.mxu0 0
      %1080 = vmatmul.mubr.bf16.gmra.mrb[0].mxu0 %v1024
      %v1081 = vpop.f32.mrb[0].mxu0
      %v1082 = vadd.f32 %v905, %v1081
      %v1083 = vpop.f32.mrb[0].mxu0
      %v1084 = vadd.f32 %v905, %v1083
      %v1085 = vpop.f32.mrb[0].mxu0
      %v1086 = vadd.f32 %v910, %v1085
      %v1087 = vpop.f32.mrb[0].mxu0
      %v1088 = vadd.f32 %v910, %v1087
      %1089 = vmatprep.mubr.bf16.mxu0 0
      %1090 = vmatmul.mubr.bf16.gmra.mrb[0].mxu0 %v1027
      %v1091 = vpop.f32.mrb[0].mxu0
      %v1092 = vadd.f32 %v915, %v1091
      %v1093 = vpop.f32.mrb[0].mxu0
      %v1094 = vadd.f32 %v915, %v1093
      %v1095 = vpop.f32.mrb[0].mxu0
      %v1096 = vadd.f32 %v920, %v1095
      %v1097 = vpop.f32.mrb[0].mxu0
      %v1098 = vadd.f32 %v920, %v1097
      %1099 = vmatprep.mubr.bf16.mxu0 0
      %1100 = vmatmul.mubr.bf16.gmra.mrb[0].mxu0 %v1030
      %v1101 = vpop.f32.mrb[0].mxu0
      %v1102 = vadd.f32 %v925, %v1101
      %v1103 = vpop.f32.mrb[0].mxu0
      %v1104 = vadd.f32 %v925, %v1103
      %v1105 = vpop.f32.mrb[0].mxu0
      %v1106 = vadd.f32 %v930, %v1105
      %v1107 = vpop.f32.mrb[0].mxu0
      %v1108 = vadd.f32 %v930, %v1107
      %1109 = vmatprep.mubr.bf16.mxu0 0
      %1110 = vmatmul.mubr.bf16.gmra.mrb[0].mxu0 %v1033
      %v1111 = vpop.f32.mrb[0].mxu0
      %v1112 = vadd.f32 %v935, %v1111
      %v1113 = vpop.f32.mrb[0].mxu0
      %v1114 = vadd.f32 %v935, %v1113
      %v1115 = vpop.f32.mrb[0].mxu0
      %v1116 = vadd.f32 %v940, %v1115
      %v1117 = vpop.f32.mrb[0].mxu0
      %v1118 = vadd.f32 %v940, %v1117
      %1119 = vmatprep.mubr.bf16.mxu0 0
      %1120 = vmatmul.mubr.bf16.gmra.mrb[0].mxu0 %v1036
      %v1121 = vpop.f32.mrb[0].mxu0
      %v1122 = vadd.f32 %v945, %v1121
      %v1123 = vpop.f32.mrb[0].mxu0
      %v1124 = vadd.f32 %v945, %v1123
      %v1125 = vpop.f32.mrb[0].mxu0
      %v1126 = vadd.f32 %v950, %v1125
      %v1127 = vpop.f32.mrb[0].mxu0
      %v1128 = vadd.f32 %v950, %v1127
      %1129 = vmatprep.mubr.bf16.mxu0 0
      %1130 = vmatmul.mubr.bf16.gmra.mrb[0].mxu0 %v1039
      %v1131 = vpop.f32.mrb[0].mxu0
      %v1132 = vadd.f32 %v955, %v1131
      %v1133 = vpop.f32.mrb[0].mxu0
      %v1134 = vadd.f32 %v955, %v1133
      %v1135 = vpop.f32.mrb[0].mxu0
      %v1136 = vadd.f32 %v960, %v1135
      %v1137 = vpop.f32.mrb[0].mxu0
      %v1138 = vadd.f32 %v960, %v1137
      %1139 = vmatprep.mubr.bf16.mxu0 0
      %1140 = vmatmul.mubr.bf16.gmra.mrb[0].mxu0 %v1042
      %v1141 = vpop.f32.mrb[0].mxu0
      %v1142 = vadd.f32 %v965, %v1141
      %v1143 = vpop.f32.mrb[0].mxu0
      %v1144 = vadd.f32 %v965, %v1143
      %v1145 = vpop.f32.mrb[0].mxu0
      %v1146 = vadd.f32 %v970, %v1145
      %v1147 = vpop.f32.mrb[0].mxu0
      %v1148 = vadd.f32 %v970, %v1147
      %1149 = vmatprep.mubr.bf16.mxu0 0
      %1150 = vmatmul.mubr.bf16.gmra.mrb[0].mxu0 %v1045
      %v1151 = vpop.f32.mrb[0].mxu0
      %v1152 = vadd.f32 %v975, %v1151
      %v1153 = vpop.f32.mrb[0].mxu0
      %v1154 = vadd.f32 %v975, %v1153
      %v1155 = vpop.f32.mrb[0].mxu0
      %v1156 = vadd.f32 %v980, %v1155
      %v1157 = vpop.f32.mrb[0].mxu0
      %v1158 = vadd.f32 %v980, %v1157
      %1159 = vdwg.mxu0
      %1160 = vst [vmem:[%s332] sm:$0xff] %v1082
      %1161 = vst [vmem:[%s332 + $0x8] sm:$0xff] %v1084
      %1162 = vst [vmem:[%s332 + $0x10] sm:$0xff] %v1086
      %1163 = vst [vmem:[%s332 + $0x18] sm:$0xff] %v1088
      %1164 = vst [vmem:[%s332 + $0x20] sm:$0xff] %v1092
      %1165 = vst [vmem:[%s332 + $0x28] sm:$0xff] %v1094
      %1166 = vst [vmem:[%s332 + $0x30] sm:$0xff] %v1096
      %1167 = vst [vmem:[%s332 + $0x38] sm:$0xff] %v1098
      %1168 = vst [vmem:[%s332 + $0x40] sm:$0xff] %v1102
      %1169 = vst [vmem:[%s332 + $0x48] sm:$0xff] %v1104
      %1170 = vst [vmem:[%s332 + $0x50] sm:$0xff] %v1106
      %1171 = vst [vmem:[%s332 + $0x58] sm:$0xff] %v1108
      %1172 = vst [vmem:[%s332 + $0x60] sm:$0xff] %v1112
      %1173 = vst [vmem:[%s332 + $0x68] sm:$0xff] %v1114
      %1174 = vst [vmem:[%s332 + $0x70] sm:$0xff] %v1116
      %1175 = vst [vmem:[%s332 + $0x78] sm:$0xff] %v1118
      %1176 = vst [vmem:[%s332 + $0x80] sm:$0xff] %v1122
      %1177 = vst [vmem:[%s332 + $0x88] sm:$0xff] %v1124
      %1178 = vst [vmem:[%s332 + $0x90] sm:$0xff] %v1126
      %1179 = vst [vmem:[%s332 + $0x98] sm:$0xff] %v1128
      %1180 = vst [vmem:[%s332 + $0xa0] sm:$0xff] %v1132
      %1181 = vst [vmem:[%s332 + $0xa8] sm:$0xff] %v1134
      %1182 = vst [vmem:[%s332 + $0xb0] sm:$0xff] %v1136
      %1183 = vst [vmem:[%s332 + $0xb8] sm:$0xff] %v1138
      %1184 = vst [vmem:[%s332 + $0xc0] sm:$0xff] %v1142
      %1185 = vst [vmem:[%s332 + $0xc8] sm:$0xff] %v1144
      %1186 = vst [vmem:[%s332 + $0xd0] sm:$0xff] %v1146
      %1187 = vst [vmem:[%s332 + $0xd8] sm:$0xff] %v1148
      %1188 = vst [vmem:[%s332 + $0xe0] sm:$0xff] %v1152
      %1189 = vst [vmem:[%s332 + $0xe8] sm:$0xff] %v1154
      %1190 = vst [vmem:[%s332 + $0xf0] sm:$0xff] %v1156
      %1191 = vst [vmem:[%s332 + $0xf8] sm:$0xff] %v1158
      %p1192 = scmp.lt.s32.totalorder %s20, 1
      %s1193 = scalar_select %p1192, %s20, 1
      %s1194 = smul.addr %s1193, 32
      %s1195 = smul.addr %s1194, 8
      %s1196 = scalar_lea.vmem %s9, %s1195
      // Predicated region
      $region57: #{small_basic_block_forward.1} parent=55 // pred_check
        %p1197 = pneg %p232
      $region58: #{small_basic_block_forward.1} parent=55 // pred_check_branch
        %1199 = sbr.rel (%p1197) target = $region60
      $region59: #{small_basic_block_forward.1} parent=55 // pred_region
        _
      $region60: #{small_basic_block_forward.1} parent=55 // pred_fallthru
        _
    $region56: #{small_basic_block_forward.1} parent=5 // pred_fallthru
      _
    %p1200 = scmp.le.s32.totalorder 2, %s15
    // Predicated region
    $region61: #{small_basic_block_forward.1} parent=5 // pred_check
      %p1201 = pneg %p1200
    $region62: #{small_basic_block_forward.1} parent=5 // pred_check_branch
      %1203 = sbr.rel (%p1201) target = $region64
    $region63: #{small_basic_block_forward.1} parent=5 // pred_region
      %s1204 = ssub.s32 %s15, 2
      // Predicated region
      $region65: #{small_basic_block_forward.1} parent=63 // pred_check
        %p1205 = pneg %p238
      $region66: #{small_basic_block_forward.1} parent=63 // pred_check_branch
        %1207 = sbr.rel (%p1205) target = $region68
      $region67: #{small_basic_block_forward.1} parent=63 // pred_region
        %p1208 = scmp.lt.s32.totalorder %s21, 1
        %s1209 = scalar_select %p1208, %s21, 1
        %s1210 = smul.addr %s1209, 32
        %s1211 = smul.addr %s1210, 8
        %s1212 = scalar_lea.vmem %s9, %s1211
      $region68: #{small_basic_block_forward.1} parent=63 // pred_fallthru
        _
    $region64: #{small_basic_block_forward.1} parent=5 // pred_fallthru
      _
  $region6: #{small_basic_block_forward.1} parent=0 // loop_footer
    %s19 = sadd.s32 1, %s15
  $region7: #{small_basic_block_forward.1} parent=0 // loop_footer_branch
    %14 = sbr.rel target = $region3
  $region8: #{small_basic_block_forward.1} parent=0 // loop_exit
    _

</llo_original>
